<compile_context>
chip_gen: v7x
topology: tpu7x:2x2x1
jax: 0.10.0
libtpu: 0.0.40
codegen_flags: <defaults>
</compile_context>

<pallas_src>
import jax
import jax.numpy as jnp
from jax.experimental import pallas as pl
from jax.experimental.pallas import tpu as pltpu


# ----------------------------- dimensions ----------------------------------
B = 16       # waveforms per call (macro-batched)
BB = 8       # waveforms per grid step (output rows per step = 8 -> unmasked vst)
T = 8        # time frames per waveform (synthetic encoder)
F = 256      # samples per frame        (lane-friendly: multiple of 128)
D_A = 256    # encoder embedding dim    (stand-in for HTSAT-base 768)
D_J = 128    # joint embedding dim      (stand-in for CLAP 512)
L = T * F    # waveform samples per item
NB = B // BB  # number of macro-batches (grid size)


# ------------------------------- kernel ------------------------------------
def clap_embed_kernel(x_ref, we_ref, bcat_ref, w1_ref, w2_ref, o_ref):
    # x_ref:    (BB*T, F)   bf16 frames for this macro-batch
    # we_ref:   (F, D_A)    bf16 encoder weight
    # bcat_ref: (1, D_A + 2*D_J) f32  [be | b1 | b2]
    # w1_ref:   (D_A, D_J)  bf16 projection-1 weight (pre-scaled by 1/T)
    # w2_ref:   (D_J, D_J)  bf16 projection-2 weight
    be = bcat_ref[:, 0:D_A]                    # (1, D_A)  f32
    b1 = bcat_ref[:, D_A:D_A + D_J]            # (1, D_J)  f32
    b2 = bcat_ref[:, D_A + D_J:D_A + 2 * D_J]  # (1, D_J)  f32

    # --- synthetic audio encoder: frame-wise linear + ReLU (bf16 MXU, f32 acc)
    h = jnp.maximum(
        jnp.dot(x_ref[...], we_ref[...], preferred_element_type=jnp.float32)
        + be, 0.0)                                            # (BB*T, D_A) f32

    # --- mean-pool over time: sum T consecutive rows per item (1/T is folded
    #     into w1 offline). Pure VPU/XLU work, no extra MXU pass, no reshape.
    pooled = jnp.concatenate(
        [jnp.sum(h[b * T:(b + 1) * T, :], axis=0, keepdims=True)
         for b in range(BB)],
        axis=0)                                               # (BB, D_A) f32

    # --- CLAP audio_projection: Linear -> ReLU -> Linear (bf16 MXU, f32 acc)
    e1 = jnp.maximum(
        jnp.dot(pooled.astype(jnp.bfloat16), w1_ref[...],
                preferred_element_type=jnp.float32) + b1, 0.0)  # (BB, D_J)
    e2 = (jnp.dot(e1.astype(jnp.bfloat16), w2_ref[...],
                  preferred_element_type=jnp.float32) + b2)     # (BB, D_J)

    # --- F.normalize(e2, dim=-1): x / max(||x||_2, 1e-12)  (f32, rsqrt on EUP)
    ss = jnp.sum(e2 * e2, axis=-1, keepdims=True)             # (BB, 1)
    inv_nrm = jax.lax.rsqrt(jnp.maximum(ss, 1e-24))
    o_ref[...] = (e2 * inv_nrm).astype(o_ref.dtype)           # (BB, D_J)


# ------------------------------- wrapper ------------------------------------
def prepare_params(params):
    """One-time (offline) param prep: bf16 weights, 1/T folded into w1,
    biases concatenated into one operand."""
    we, be, w1, b1, w2, b2 = params
    bcat = jnp.concatenate([be, b1, b2], axis=1)              # (1, D_A + 2*D_J) f32
    return (we.astype(jnp.bfloat16),
            bcat,
            (w1 * (1.0 / T)).astype(jnp.bfloat16),            # mean folded here
            w2.astype(jnp.bfloat16))


def clap_forward(wave, prepared):
    """wave: (B, L) float32 -> (B, D_J) float32 L2-normalized embeddings."""
    we_bf, bcat, w1_bf, w2_bf = prepared

    # Framing glue: (B, L) -> (B*T, F); bf16 halves the activation DMA.
    frames = wave.reshape(B * T, F).astype(jnp.bfloat16)

    flops = 2 * (B * T * F * D_A            # encoder matmul
                 + B * D_A * D_J            # projection 1
                 + B * D_J * D_J)           # projection 2
    bytes_accessed = (2 * (B * T * F)                   # frames (bf16)
                      + 2 * (F * D_A)                   # we (bf16)
                      + 4 * (D_A + 2 * D_J)             # biases (f32)
                      + 2 * (D_A * D_J)                 # w1 (bf16)
                      + 2 * (D_J * D_J)                 # w2 (bf16)
                      + 4 * (B * D_J))                  # output (f32)

    vmem = pltpu.MemorySpace.VMEM
    out = pl.pallas_call(
        clap_embed_kernel,
        out_shape=jax.ShapeDtypeStruct((B, D_J), jnp.float32),
        grid_spec=pltpu.PrefetchScalarGridSpec(
            num_scalar_prefetch=0,
            grid=(NB,),
            in_specs=[
                # frames: one macro-batch per grid step
                pl.BlockSpec((BB * T, F), lambda i: (i, 0), memory_space=vmem),
                # weights/biases: constant index_map -> VMEM-resident across steps
                pl.BlockSpec((F, D_A), lambda i: (0, 0), memory_space=vmem),
                pl.BlockSpec((1, D_A + 2 * D_J), lambda i: (0, 0),
                             memory_space=vmem),
                pl.BlockSpec((D_A, D_J), lambda i: (0, 0), memory_space=vmem),
                pl.BlockSpec((D_J, D_J), lambda i: (0, 0), memory_space=vmem),
            ],
            out_specs=pl.BlockSpec((BB, D_J), lambda i: (i, 0),
                                   memory_space=vmem),
        ),
        compiler_params=pltpu.CompilerParams(
            dimension_semantics=("parallel",)),
        cost_estimate=pl.CostEstimate(
            flops=flops, transcendentals=B, bytes_accessed=bytes_accessed),
    )(frames, we_bf, bcat, w1_bf, w2_bf)

    return out


# ------------------------ pure-JAX reference (check) -------------------------
def clap_forward_ref(wave, params):
    """Mirrors the kernel's precision policy: bf16 matmul operands, f32
    accumulation, f32 elementwise/normalize."""
    we, be, w1, b1, w2, b2 = params
    frames = wave.reshape(B, T, F).astype(jnp.bfloat16)
    h = jnp.maximum(
        jnp.einsum("btf,fd->btd", frames, we.astype(jnp.bfloat16),
                   preferred_element_type=jnp.float32) + be, 0.0)
    pooled = jnp.mean(h, axis=1)                               # (B, D_A) f32
    e1 = jnp.maximum(
        jnp.dot(pooled.astype(jnp.bfloat16), w1.astype(jnp.bfloat16),
                preferred_element_type=jnp.float32) + b1, 0.0)
    e2 = (jnp.dot(e1.astype(jnp.bfloat16), w2.astype(jnp.bfloat16),
                  preferred_element_type=jnp.float32) + b2)
    nrm = jnp.sqrt(jnp.sum(e2 * e2, axis=-1, keepdims=True))
    return e2 / jnp.maximum(nrm, 1e-12)


# --------------------------------- main --------------------------------------
if __name__ == "__main__":
    key = jax.random.PRNGKey(0)
    k_x, k_we, k_w1, k_w2 = jax.random.split(key, 4)

    # deterministic synthetic parameters (shapes mirror: encoder-out D_A,
    # projection Linear(D_A, D_J) -> ReLU -> Linear(D_J, D_J))
    we = jax.random.normal(k_we, (F, D_A), jnp.float32) * 0.05
    be = jnp.zeros((1, D_A), jnp.float32)
    w1 = jax.random.normal(k_w1, (D_A, D_J), jnp.float32) * 0.05
    b1 = jnp.zeros((1, D_J), jnp.float32)
    w2 = jax.random.normal(k_w2, (D_J, D_J), jnp.float32) * 0.05
    b2 = jnp.zeros((1, D_J), jnp.float32)
    params = (we, be, w1, b1, w2, b2)
    prepared = prepare_params(params)          # offline: bf16 cast, 1/T fold

    # waveform input, analogous to x of shape (batch, num_samples)
    wave = jax.random.normal(k_x, (B, L), jnp.float32)

    out = clap_forward(wave, prepared)
    out = jax.block_until_ready(out)

    ref = clap_forward_ref(wave, params)
    assert out.shape == (B, D_J)
    # bf16 matmul operands -> relaxed tolerance vs. the mirrored reference
    assert jnp.allclose(out, ref, atol=5e-3, rtol=5e-3), "mismatch vs reference"
    # embeddings are unit-norm, like F.normalize output (normalization is f32)
    assert jnp.allclose(jnp.linalg.norm(out, axis=-1), 1.0, atol=1e-3)

    print("KERNEL_OK")
</pallas_src>

<mosaic_0001>
module attributes {stable_mosaic.version = 11 : i64} {
  func.func @clap_embed_kernel(%arg0: i32, %arg1: memref<64x256xbf16, #tpu.memory_space<vmem>>, %arg2: memref<256x256xbf16, #tpu.memory_space<vmem>>, %arg3: memref<1x512xf32, #tpu.memory_space<vmem>>, %arg4: memref<256x128xbf16, #tpu.memory_space<vmem>>, %arg5: memref<128x128xbf16, #tpu.memory_space<vmem>>, %arg6: memref<8x128xf32, #tpu.memory_space<vmem>>) attributes {dimension_semantics = [#tpu.dimension_semantics<parallel>], iteration_bounds = array<i64: 2>, scalar_prefetch = 0 : i64, scratch_operands = 0 : i64, tpu.core_type = #tpu.core_type<tc>, window_params = [{transform_indices = @transform_0, window_bounds = array<i64: 64, 256>}, {pipeline_mode = #tpu.pipeline_mode<synchronous>, transform_indices = @transform_1, window_bounds = array<i64: 256, 256>}, {pipeline_mode = #tpu.pipeline_mode<synchronous>, transform_indices = @transform_2, window_bounds = array<i64: 1, 512>}, {pipeline_mode = #tpu.pipeline_mode<synchronous>, transform_indices = @transform_3, window_bounds = array<i64: 256, 128>}, {pipeline_mode = #tpu.pipeline_mode<synchronous>, transform_indices = @transform_4, window_bounds = array<i64: 128, 128>}, {transform_indices = @transform_5, window_bounds = array<i64: 8, 128>}]} {
    %c0 = arith.constant 0 : index
    %c0_0 = arith.constant 0 : index
    %0 = vector.load %arg3[%c0, %c0_0] : memref<1x512xf32, #tpu.memory_space<vmem>>, vector<1x256xf32>
    %c0_1 = arith.constant 0 : index
    %c256 = arith.constant 256 : index
    %1 = vector.load %arg3[%c0_1, %c256] : memref<1x512xf32, #tpu.memory_space<vmem>>, vector<1x128xf32>
    %c0_2 = arith.constant 0 : index
    %c384 = arith.constant 384 : index
    %2 = vector.load %arg3[%c0_2, %c384] : memref<1x512xf32, #tpu.memory_space<vmem>>, vector<1x128xf32>
    %c0_3 = arith.constant 0 : index
    %c0_4 = arith.constant 0 : index
    %3 = vector.load %arg1[%c0_3, %c0_4] : memref<64x256xbf16, #tpu.memory_space<vmem>>, vector<64x256xbf16>
    %c0_5 = arith.constant 0 : index
    %c0_6 = arith.constant 0 : index
    %4 = vector.load %arg2[%c0_5, %c0_6] : memref<256x256xbf16, #tpu.memory_space<vmem>>, vector<256x256xbf16>
    %cst = arith.constant dense<0.000000e+00> : vector<64x256xf32>
    %5 = tpu.matmul %3, %4, %cst {dimension_numbers = #tpu.dot_dimension_numbers<[1], [0], [0], [1], [0, 0, 1, 1], [], []>} : vector<64x256xbf16>, vector<256x256xbf16>, vector<64x256xf32> -> vector<64x256xf32>
    %6 = vector.broadcast %0 : vector<1x256xf32> to vector<64x256xf32>
    %7 = arith.addf %5, %6 : vector<64x256xf32>
    %cst_7 = arith.constant 0.000000e+00 : f32
    %8 = vector.broadcast %cst_7 : f32 to vector<64x256xf32>
    %9 = arith.maximumf %7, %8 : vector<64x256xf32>
    %10 = vector.extract_strided_slice %9 {offsets = [0, 0], sizes = [8, 256], strides = [1, 1]} : vector<64x256xf32> to vector<8x256xf32>
    %cst_8 = arith.constant dense<0.000000e+00> : vector<256xf32>
    %11 = vector.multi_reduction <add>, %10, %cst_8 [0] : vector<8x256xf32> to vector<256xf32>
    %12 = vector.shape_cast %11 : vector<256xf32> to vector<1x256xf32>
    %13 = vector.extract_strided_slice %9 {offsets = [8, 0], sizes = [8, 256], strides = [1, 1]} : vector<64x256xf32> to vector<8x256xf32>
    %cst_9 = arith.constant dense<0.000000e+00> : vector<256xf32>
    %14 = vector.multi_reduction <add>, %13, %cst_9 [0] : vector<8x256xf32> to vector<256xf32>
    %15 = vector.shape_cast %14 : vector<256xf32> to vector<1x256xf32>
    %16 = vector.extract_strided_slice %9 {offsets = [16, 0], sizes = [8, 256], strides = [1, 1]} : vector<64x256xf32> to vector<8x256xf32>
    %cst_10 = arith.constant dense<0.000000e+00> : vector<256xf32>
    %17 = vector.multi_reduction <add>, %16, %cst_10 [0] : vector<8x256xf32> to vector<256xf32>
    %18 = vector.shape_cast %17 : vector<256xf32> to vector<1x256xf32>
    %19 = vector.extract_strided_slice %9 {offsets = [24, 0], sizes = [8, 256], strides = [1, 1]} : vector<64x256xf32> to vector<8x256xf32>
    %cst_11 = arith.constant dense<0.000000e+00> : vector<256xf32>
    %20 = vector.multi_reduction <add>, %19, %cst_11 [0] : vector<8x256xf32> to vector<256xf32>
    %21 = vector.shape_cast %20 : vector<256xf32> to vector<1x256xf32>
    %22 = vector.extract_strided_slice %9 {offsets = [32, 0], sizes = [8, 256], strides = [1, 1]} : vector<64x256xf32> to vector<8x256xf32>
    %cst_12 = arith.constant dense<0.000000e+00> : vector<256xf32>
    %23 = vector.multi_reduction <add>, %22, %cst_12 [0] : vector<8x256xf32> to vector<256xf32>
    %24 = vector.shape_cast %23 : vector<256xf32> to vector<1x256xf32>
    %25 = vector.extract_strided_slice %9 {offsets = [40, 0], sizes = [8, 256], strides = [1, 1]} : vector<64x256xf32> to vector<8x256xf32>
    %cst_13 = arith.constant dense<0.000000e+00> : vector<256xf32>
    %26 = vector.multi_reduction <add>, %25, %cst_13 [0] : vector<8x256xf32> to vector<256xf32>
    %27 = vector.shape_cast %26 : vector<256xf32> to vector<1x256xf32>
    %28 = vector.extract_strided_slice %9 {offsets = [48, 0], sizes = [8, 256], strides = [1, 1]} : vector<64x256xf32> to vector<8x256xf32>
    %cst_14 = arith.constant dense<0.000000e+00> : vector<256xf32>
    %29 = vector.multi_reduction <add>, %28, %cst_14 [0] : vector<8x256xf32> to vector<256xf32>
    %30 = vector.shape_cast %29 : vector<256xf32> to vector<1x256xf32>
    %31 = vector.extract_strided_slice %9 {offsets = [56, 0], sizes = [8, 256], strides = [1, 1]} : vector<64x256xf32> to vector<8x256xf32>
    %cst_15 = arith.constant dense<0.000000e+00> : vector<256xf32>
    %32 = vector.multi_reduction <add>, %31, %cst_15 [0] : vector<8x256xf32> to vector<256xf32>
    %33 = vector.shape_cast %32 : vector<256xf32> to vector<1x256xf32>
    %34 = tpu.concatenate %12, %15, %18, %21, %24, %27, %30, %33 in 0 : vector<1x256xf32>, vector<1x256xf32>, vector<1x256xf32>, vector<1x256xf32>, vector<1x256xf32>, vector<1x256xf32>, vector<1x256xf32>, vector<1x256xf32> -> vector<8x256xf32>
    %35 = arith.truncf %34 : vector<8x256xf32> to vector<8x256xbf16>
    %c0_16 = arith.constant 0 : index
    %c0_17 = arith.constant 0 : index
    %36 = vector.load %arg4[%c0_16, %c0_17] : memref<256x128xbf16, #tpu.memory_space<vmem>>, vector<256x128xbf16>
    %cst_18 = arith.constant dense<0.000000e+00> : vector<8x128xf32>
    %37 = tpu.matmul %35, %36, %cst_18 {dimension_numbers = #tpu.dot_dimension_numbers<[1], [0], [0], [1], [0, 0, 1, 1], [], []>} : vector<8x256xbf16>, vector<256x128xbf16>, vector<8x128xf32> -> vector<8x128xf32>
    %38 = vector.broadcast %1 : vector<1x128xf32> to vector<8x128xf32>
    %39 = arith.addf %37, %38 : vector<8x128xf32>
    %cst_19 = arith.constant 0.000000e+00 : f32
    %40 = vector.broadcast %cst_19 : f32 to vector<8x128xf32>
    %41 = arith.maximumf %39, %40 : vector<8x128xf32>
    %42 = arith.truncf %41 : vector<8x128xf32> to vector<8x128xbf16>
    %c0_20 = arith.constant 0 : index
    %c0_21 = arith.constant 0 : index
    %43 = vector.load %arg5[%c0_20, %c0_21] : memref<128x128xbf16, #tpu.memory_space<vmem>>, vector<128x128xbf16>
    %cst_22 = arith.constant dense<0.000000e+00> : vector<8x128xf32>
    %44 = tpu.matmul %42, %43, %cst_22 {dimension_numbers = #tpu.dot_dimension_numbers<[1], [0], [0], [1], [0, 0, 1, 1], [], []>} : vector<8x128xbf16>, vector<128x128xbf16>, vector<8x128xf32> -> vector<8x128xf32>
    %45 = vector.broadcast %2 : vector<1x128xf32> to vector<8x128xf32>
    %46 = arith.addf %44, %45 : vector<8x128xf32>
    %47 = arith.mulf %46, %46 : vector<8x128xf32>
    %cst_23 = arith.constant dense<0.000000e+00> : vector<8xf32>
    %48 = vector.multi_reduction <add>, %47, %cst_23 [1] : vector<8x128xf32> to vector<8xf32>
    %49 = vector.shape_cast %48 : vector<8xf32> to vector<8x1xf32>
    %cst_24 = arith.constant 1.000000e-24 : f32
    %50 = vector.broadcast %cst_24 : f32 to vector<8x1xf32>
    %51 = arith.maximumf %49, %50 : vector<8x1xf32>
    %52 = math.rsqrt %51 : vector<8x1xf32>
    %53 = vector.broadcast %52 : vector<8x1xf32> to vector<8x128xf32>
    %54 = arith.mulf %46, %53 : vector<8x128xf32>
    %c0_25 = arith.constant 0 : index
    %c0_26 = arith.constant 0 : index
    %55 = vector.load %arg6[%c0_25, %c0_26] : memref<8x128xf32, #tpu.memory_space<vmem>>, vector<8x128xf32>
    tpu.vector_store %arg6[%c0_25, %c0_26], %54 {strides = array<i32>} : memref<8x128xf32, #tpu.memory_space<vmem>>, vector<8x128xf32>,
    return
  }
  func.func @transform_0(%arg0: i32) -> (i32, i32) {
    %c0_i32 = arith.constant 0 : i32
    %c0_i32_0 = arith.constant 0 : i32
    return %arg0, %c0_i32 : i32, i32
  }
  func.func @transform_1(%arg0: i32) -> (i32, i32) {
    %c0_i32 = arith.constant 0 : i32
    %c0_i32_0 = arith.constant 0 : i32
    %c0_i32_1 = arith.constant 0 : i32
    return %c0_i32, %c0_i32_0 : i32, i32
  }
  func.func @transform_2(%arg0: i32) -> (i32, i32) {
    %c0_i32 = arith.constant 0 : i32
    %c0_i32_0 = arith.constant 0 : i32
    %c0_i32_1 = arith.constant 0 : i32
    return %c0_i32, %c0_i32_0 : i32, i32
  }
  func.func @transform_3(%arg0: i32) -> (i32, i32) {
    %c0_i32 = arith.constant 0 : i32
    %c0_i32_0 = arith.constant 0 : i32
    %c0_i32_1 = arith.constant 0 : i32
    return %c0_i32, %c0_i32_0 : i32, i32
  }
  func.func @transform_4(%arg0: i32) -> (i32, i32) {
    %c0_i32 = arith.constant 0 : i32
    %c0_i32_0 = arith.constant 0 : i32
    %c0_i32_1 = arith.constant 0 : i32
    return %c0_i32, %c0_i32_0 : i32, i32
  }
  func.func @transform_5(%arg0: i32) -> (i32, i32) {
    %c0_i32 = arith.constant 0 : i32
    %c0_i32_0 = arith.constant 0 : i32
    return %arg0, %c0_i32 : i32, i32
  }
}

</mosaic_0001>

<llo_original>
// kernel: tpu_custom_call.1
$region0: #{tpu_custom_call.1}
  #allocation0 [shape = 'u32[]', space=smem, size = 0x4, offset = 0x4, fixed_abs, tag = 'smem constant byte address 0x4 - core index']
  #allocation1 [shape = 'u32[144,128]{1,0:T(1,128)}', space=vmem, size = 0x12000, scoped, tag = 'internal scratch']
  %s0 = inlined_call_operand.hbm [shape: bf16[128,256], index: 0, kind: input, shape index: {}]
  %s1 = inlined_call_operand.hbm [shape: bf16[256,256], index: 1, kind: input, shape index: {}]
  %s2 = inlined_call_operand.vmem [shape: f32[1,512], index: 2, kind: input, shape index: {}]
  %s3 = inlined_call_operand.hbm [shape: bf16[256,128], index: 3, kind: input, shape index: {}]
  %s4 = inlined_call_operand.hbm [shape: bf16[128,128], index: 4, kind: input, shape index: {}]
  %s5 = inlined_call_operand.hbm [shape: f32[16,128], index: 5, kind: output, shape index: {}]
  %s6 = sld [smem:[#allocation0]]
  $region69: #{tpu_custom_call.1} parent=0
    _
  %s8 = ssub.s32 1, %s6
  %s9 = scalar_select 0, %s8, %s6
  $region1: #{tpu_custom_call.1} parent=0
    #allocation2 [shape = 'u8[65536]{0}', space=vmem, size = 0x10000, scoped, tag = 'input window, operand 0']
    #allocation3 [shape = 's32[2]{0}', space=sflag, size = 0x8, scoped, tag = 'scoped memory for tpu_custom_call.1']
    #allocation4 [shape = 's32[2]{0}', space=sflag, size = 0x8, scoped, tag = 'scoped memory for tpu_custom_call.1']
    #allocation5 [shape = 'u8[131072]{0}', space=vmem, size = 0x20000, scoped, tag = 'input window, operand 1, single buffered']
    #allocation6 [shape = 's32[1]{0}', space=sflag, size = 0x4, scoped, tag = 'scoped memory for tpu_custom_call.1']
    #allocation7 [shape = 'u8[65536]{0}', space=vmem, size = 0x10000, scoped, tag = 'input window, operand 3, single buffered']
    #allocation8 [shape = 'u8[32768]{0}', space=vmem, size = 0x8000, scoped, tag = 'input window, operand 4, single buffered']
    #allocation9 [shape = 's32[1]{0}', space=sflag, size = 0x4, scoped, tag = 'scoped memory for tpu_custom_call.1']
    #allocation10 [shape = 'u8[8192]{0}', space=vmem, size = 0x2000, scoped, tag = 'output window, operand 0']
    %10 = vsyncpa [#allocation3], 0
    %s11 = scalar_lea.sflag [#allocation3], 1
    %12 = vsyncpa %s11, 0
    %13 = vsyncpa [#allocation6], 0
    %14 = vsyncpa [#allocation9], 0
    %15 = vsyncpa [#allocation4], 0
    %s16 = scalar_lea.sflag [#allocation4], 1
    %17 = vsyncpa %s16, 0
    loop: start=0, step=1, limit=4
    $region2: #{tpu_custom_call.1} parent=1 // loop_pre_header
      _
    $region3: #{tpu_custom_call.1} parent=1 // loop_header
      %s19 = sphi 0, %s23
      %p20 = scmp.ge.s32.totalorder %s19, 4
      %s29 = sphi 0, %s31
      %s32 = sphi 0, %s29
      %s33 = sphi 0, %s32
      %s49 = sphi 0, %s33
      %s53 = sphi 0, %s53
      %s55 = sphi 0, %s53
      %s56 = sphi 0, %s55
      %s70 = sphi 0, %s56
      %s74 = sphi 0, %s74
      %s76 = sphi 0, %s74
      %s77 = sphi 0, %s76
      %s91 = sphi 0, %s77
      %s95 = sphi 0, %s95
      %s97 = sphi 0, %s95
      %s98 = sphi 0, %s97
      %s112 = sphi 0, %s98
      %s116 = sphi 0, %s116
      %s118 = sphi 0, %s116
      %s119 = sphi 0, %s118
      %s133 = sphi 0, %s119
      %s139 = sphi 0, %s141
      %s142 = sphi 0, %s139
      %s143 = sphi 0, %s142
      %s159 = sphi 0, %s143
    $region4: #{tpu_custom_call.1} parent=1 // loop_header_branch
      %22 = sbr.rel (%p20) target = $region8
    $region5: #{tpu_custom_call.1} parent=1 // loop_body
      %s24 = ssub.s32 %s19, 1
      %s25 = ssub.s32 %s19, 2
      %s26 = sadd.s32 %s19, 1
      %s27 = ssub.s32 %s19, %s26
      %p28 = scmp.eq.s32.totalorder %s27, 0
      %s30 = sadd.s32 %s29, 1
      %s31 = scalar_select %p28, %s29, %s30
      %p34 = pneg %p28
      %p35 = scmp.eq.s32.totalorder %s19, 1
      %p36 = por %p34, %p35
      %p37 = scmp.ne.s32.totalorder %s29, %s32
      %p38 = scmp.eq.s32.totalorder %s19, 0
      %p39 = por %p37, %p38
      %p40 = scmp.ne.s32.totalorder %s29, %s32
      %p41 = scmp.eq.s32.totalorder %s24, 1
      %p42 = por %p40, %p41
      %p43 = scmp.ne.s32.totalorder %s32, %s33
      %p44 = scmp.eq.s32.totalorder %s24, 0
      %p45 = por %p43, %p44
      %p46 = scmp.ne.s32.totalorder %s32, %s33
      %p47 = scmp.eq.s32.totalorder %s25, 1
      %p48 = por %p46, %p47
      %p50 = scmp.ne.s32.totalorder %s33, %s49
      %p51 = scmp.eq.s32.totalorder %s25, 0
      %p52 = por %p50, %p51
      %s54 = sadd.s32 %s53, 1
      %p57 = scmp.eq.s32.totalorder %s19, 1
      %p58 = scmp.ne.s32.totalorder %s53, %s55
      %p59 = scmp.eq.s32.totalorder %s19, 0
      %p60 = por %p58, %p59
      %p61 = scmp.ne.s32.totalorder %s53, %s55
      %p62 = scmp.eq.s32.totalorder %s24, 1
      %p63 = por %p61, %p62
      %p64 = scmp.ne.s32.totalorder %s55, %s56
      %p65 = scmp.eq.s32.totalorder %s24, 0
      %p66 = por %p64, %p65
      %p67 = scmp.ne.s32.totalorder %s55, %s56
      %p68 = scmp.eq.s32.totalorder %s25, 1
      %p69 = por %p67, %p68
      %p71 = scmp.ne.s32.totalorder %s56, %s70
      %p72 = scmp.eq.s32.totalorder %s25, 0
      %p73 = por %p71, %p72
      %s75 = sadd.s32 %s74, 1
      %p78 = scmp.eq.s32.totalorder %s19, 1
      %p79 = scmp.ne.s32.totalorder %s74, %s76
      %p80 = scmp.eq.s32.totalorder %s19, 0
      %p81 = por %p79, %p80
      %p82 = scmp.ne.s32.totalorder %s74, %s76
      %p83 = scmp.eq.s32.totalorder %s24, 1
      %p84 = por %p82, %p83
      %p85 = scmp.ne.s32.totalorder %s76, %s77
      %p86 = scmp.eq.s32.totalorder %s24, 0
      %p87 = por %p85, %p86
      %p88 = scmp.ne.s32.totalorder %s76, %s77
      %p89 = scmp.eq.s32.totalorder %s25, 1
      %p90 = por %p88, %p89
      %p92 = scmp.ne.s32.totalorder %s77, %s91
      %p93 = scmp.eq.s32.totalorder %s25, 0
      %p94 = por %p92, %p93
      %s96 = sadd.s32 %s95, 1
      %p99 = scmp.eq.s32.totalorder %s19, 1
      %p100 = scmp.ne.s32.totalorder %s95, %s97
      %p101 = scmp.eq.s32.totalorder %s19, 0
      %p102 = por %p100, %p101
      %p103 = scmp.ne.s32.totalorder %s95, %s97
      %p104 = scmp.eq.s32.totalorder %s24, 1
      %p105 = por %p103, %p104
      %p106 = scmp.ne.s32.totalorder %s97, %s98
      %p107 = scmp.eq.s32.totalorder %s24, 0
      %p108 = por %p106, %p107
      %p109 = scmp.ne.s32.totalorder %s97, %s98
      %p110 = scmp.eq.s32.totalorder %s25, 1
      %p111 = por %p109, %p110
      %p113 = scmp.ne.s32.totalorder %s98, %s112
      %p114 = scmp.eq.s32.totalorder %s25, 0
      %p115 = por %p113, %p114
      %s117 = sadd.s32 %s116, 1
      %p120 = scmp.eq.s32.totalorder %s19, 1
      %p121 = scmp.ne.s32.totalorder %s116, %s118
      %p122 = scmp.eq.s32.totalorder %s19, 0
      %p123 = por %p121, %p122
      %p124 = scmp.ne.s32.totalorder %s116, %s118
      %p125 = scmp.eq.s32.totalorder %s24, 1
      %p126 = por %p124, %p125
      %p127 = scmp.ne.s32.totalorder %s118, %s119
      %p128 = scmp.eq.s32.totalorder %s24, 0
      %p129 = por %p127, %p128
      %p130 = scmp.ne.s32.totalorder %s118, %s119
      %p131 = scmp.eq.s32.totalorder %s25, 1
      %p132 = por %p130, %p131
      %p134 = scmp.ne.s32.totalorder %s119, %s133
      %p135 = scmp.eq.s32.totalorder %s25, 0
      %p136 = por %p134, %p135
      %s137 = ssub.s32 %s19, %s26
      %p138 = scmp.eq.s32.totalorder %s137, 0
      %s140 = sadd.s32 %s139, 1
      %s141 = scalar_select %p138, %s139, %s140
      %p144 = pneg %p138
      %p145 = scmp.eq.s32.totalorder %s19, 1
      %p146 = por %p144, %p145
      %p147 = scmp.ne.s32.totalorder %s139, %s142
      %p148 = scmp.eq.s32.totalorder %s19, 0
      %p149 = por %p147, %p148
      %p150 = scmp.ne.s32.totalorder %s139, %s142
      %p151 = scmp.eq.s32.totalorder %s24, 1
      %p152 = por %p150, %p151
      %p153 = scmp.ne.s32.totalorder %s142, %s143
      %p154 = scmp.eq.s32.totalorder %s24, 0
      %p155 = por %p153, %p154
      %p156 = scmp.ne.s32.totalorder %s142, %s143
      %p157 = scmp.eq.s32.totalorder %s25, 1
      %p158 = por %p156, %p157
      %p160 = scmp.ne.s32.totalorder %s143, %s159
      %p161 = scmp.eq.s32.totalorder %s25, 0
      %p162 = por %p160, %p161
      %p163 = scmp.le.s32.totalorder 1, %s19
      %p164 = scmp.lt.s32.totalorder %s19, 3
      %p165 = pnand %p163, %p164
      %p166 = pneg %p165
      // Predicated region
      $region9: #{tpu_custom_call.1} parent=5 // pred_check
        _
      $region10: #{tpu_custom_call.1} parent=5 // pred_check_branch
        %168 = sbr.rel (%p165) target = $region12
      $region11: #{tpu_custom_call.1} parent=5 // pred_region
        %s169 = ssub.s32 %s19, 1
        // Predicated region
        $region13: #{tpu_custom_call.1} parent=11 // pred_check
          %p170 = pneg %p66
        $region14: #{tpu_custom_call.1} parent=11 // pred_check_branch
          %172 = sbr.rel (%p170) target = $region16
        $region15: #{tpu_custom_call.1} parent=11 // pred_region
          %s174 = ssub.s32 4096, 4096
          %175 = vsyncadd [#allocation6], %s174
          %s176 = sshll.u32 [#allocation5], 4
          %s177 = int_to_ptr.vmem [resolvable:$true] %s176
          %182 = dma.hbm_to_vmem [thread:$0]  %s1, 4096, %s177, [#allocation6], 128, 128, 8
        $region16: #{tpu_custom_call.1} parent=11 // pred_fallthru
          _
        // Predicated region
        $region17: #{tpu_custom_call.1} parent=11 // pred_check
          %p183 = pneg %p87
        $region18: #{tpu_custom_call.1} parent=11 // pred_check_branch
          %185 = sbr.rel (%p183) target = $region20
        $region19: #{tpu_custom_call.1} parent=11 // pred_region
          _
        $region20: #{tpu_custom_call.1} parent=11 // pred_fallthru
          _
        // Predicated region
        $region21: #{tpu_custom_call.1} parent=11 // pred_check
          %p186 = pneg %p108
        $region22: #{tpu_custom_call.1} parent=11 // pred_check_branch
          %188 = sbr.rel (%p186) target = $region24
        $region23: #{tpu_custom_call.1} parent=11 // pred_region
          %s190 = ssub.s32 2048, 2048
          %191 = vsyncadd [#allocation6], %s190
          %s192 = sshll.u32 [#allocation7], 4
          %s193 = int_to_ptr.vmem [resolvable:$true] %s192
          %198 = dma.hbm_to_vmem [thread:$0]  %s3, 2048, %s193, [#allocation6], 64, 64, 4
        $region24: #{tpu_custom_call.1} parent=11 // pred_fallthru
          _
        // Predicated region
        $region25: #{tpu_custom_call.1} parent=11 // pred_check
          %p199 = pneg %p129
        $region26: #{tpu_custom_call.1} parent=11 // pred_check_branch
          %201 = sbr.rel (%p199) target = $region28
        $region27: #{tpu_custom_call.1} parent=11 // pred_region
          %s203 = ssub.s32 1024, 1024
          %204 = vsyncadd [#allocation9], %s203
          %s205 = sshll.u32 [#allocation8], 4
          %s206 = int_to_ptr.vmem [resolvable:$true] %s205
          %211 = dma.hbm_to_vmem [thread:$0]  %s4, 1024, %s206, [#allocation9], 64, 64, 4
        $region28: #{tpu_custom_call.1} parent=11 // pred_fallthru
          _
      $region12: #{tpu_custom_call.1} parent=5 // pred_fallthru
        _
      %p212 = scmp.lt.s32.totalorder %s19, 2
      // Predicated region
      $region29: #{tpu_custom_call.1} parent=5 // pred_check
        %p213 = pneg %p212
      $region30: #{tpu_custom_call.1} parent=5 // pred_check_branch
        %215 = sbr.rel (%p213) target = $region32
      $region31: #{tpu_custom_call.1} parent=5 // pred_region
        // Predicated region
        $region33: #{tpu_custom_call.1} parent=31 // pred_check
          %p216 = pneg %p39
        $region34: #{tpu_custom_call.1} parent=31 // pred_check_branch
          %218 = sbr.rel (%p216) target = $region36
        $region35: #{tpu_custom_call.1} parent=31 // pred_region
          %s219 = sand.u32 %s29, 1
          %s220 = scalar_lea.sflag [#allocation3], %s219
          %s221 = sand.u32 %s29, 1
          %s222 = smul.addr %s221, 64
          %s223 = scalar_lea.vmem [#allocation2], %s222
          %s224 = smul.u32 8, %s19
          %s226 = ssub.s32 1024, 1024
          %227 = vsyncadd %s220, %s226
          %s228 = smul.addr %s224, 2
          %s229 = smul.addr %s228, 64
          %s230 = scalar_lea.hbm %s0, %s229
          %s231 = sshll.u32 %s223, 4
          %s232 = int_to_ptr.vmem [resolvable:$true] %s231
          %237 = dma.hbm_to_vmem [thread:$0]  %s230, 1024, %s232, %s220, 128, 128, 8
        $region36: #{tpu_custom_call.1} parent=31 // pred_fallthru
          _
      $region32: #{tpu_custom_call.1} parent=5 // pred_fallthru
        _
      %p238 = scmp.le.s32.totalorder 1, %s19
      %p239 = scmp.lt.s32.totalorder %s19, 3
      %p240 = pnand %p238, %p239
      %p241 = pneg %p240
      // Predicated region
      $region37: #{tpu_custom_call.1} parent=5 // pred_check
        _
      $region38: #{tpu_custom_call.1} parent=5 // pred_check_branch
        %243 = sbr.rel (%p240) target = $region40
      $region39: #{tpu_custom_call.1} parent=5 // pred_region
        %s244 = ssub.s32 %s19, 1
        %s245 = sand.u32 %s32, 1
        %s246 = scalar_lea.sflag [#allocation3], %s245
        %s247 = sand.u32 %s32, 1
        %s248 = smul.addr %s247, 64
        %s249 = scalar_lea.vmem [#allocation2], %s248
        // Predicated region
        $region41: #{tpu_custom_call.1} parent=39 // pred_check
          %p250 = pneg %p45
        $region42: #{tpu_custom_call.1} parent=39 // pred_check_branch
          %252 = sbr.rel (%p250) target = $region44
        $region43: #{tpu_custom_call.1} parent=39 // pred_region
          %253 = dma.done %s246, 1024
        $region44: #{tpu_custom_call.1} parent=39 // pred_fallthru
          _
        // Predicated region
        $region45: #{tpu_custom_call.1} parent=39 // pred_check
          %p254 = pneg %p66
        $region46: #{tpu_custom_call.1} parent=39 // pred_check_branch
          %256 = sbr.rel (%p254) target = $region48
        $region47: #{tpu_custom_call.1} parent=39 // pred_region
          %257 = dma.done [#allocation6], 4096
        $region48: #{tpu_custom_call.1} parent=39 // pred_fallthru
          _
        // Predicated region
        $region49: #{tpu_custom_call.1} parent=39 // pred_check
          %p258 = pneg %p108
        $region50: #{tpu_custom_call.1} parent=39 // pred_check_branch
          %260 = sbr.rel (%p258) target = $region52
        $region51: #{tpu_custom_call.1} parent=39 // pred_region
          %261 = dma.done [#allocation6], 2048
        $region52: #{tpu_custom_call.1} parent=39 // pred_fallthru
          _
        // Predicated region
        $region53: #{tpu_custom_call.1} parent=39 // pred_check
          %p262 = pneg %p129
        $region54: #{tpu_custom_call.1} parent=39 // pred_check_branch
          %264 = sbr.rel (%p262) target = $region56
        $region55: #{tpu_custom_call.1} parent=39 // pred_region
          %265 = dma.done [#allocation9], 1024
        $region56: #{tpu_custom_call.1} parent=39 // pred_fallthru
          _
        %s266 = sand.u32 %s32, 1
        %s267 = scalar_lea.sflag [#allocation3], %s266
        %s268 = sand.u32 %s32, 1
        %s269 = smul.addr %s268, 64
        %s270 = scalar_lea.vmem [#allocation2], %s269
        %p271 = pneg %p45
        %p272 = pneg %p42
        %p273 = pneg %p66
        %p274 = pneg %p63
        %p275 = pneg %p87
        %p276 = pneg %p84
        %p277 = pneg %p108
        %p278 = pneg %p105
        %p279 = pneg %p129
        %p280 = pneg %p126
        %p281 = pneg %p155
        %p282 = pneg %p152
        %s283 = sand.u32 %s142, 1
        %s284 = scalar_lea.sflag [#allocation4], %s283
        %s285 = sand.u32 %s142, 1
        %s286 = smul.addr %s285, 8
        %s287 = scalar_lea.vmem [#allocation10], %s286
        %s288 = smul.u32 8, %s24
        %v290 = vld [vmem:[%s2] sm:$0x3]
        %v291 = vld [vmem:[%s2 + $0x2] sm:$0x1]
        %v292 = vld [vmem:[%s2 + $0x3] sm:$0x1]
        %v293 = vld [vmem:[%s249] sm:$0xff]
        %v294 = vld [vmem:[%s249 + $0x8] sm:$0xff]
        %v295 = vld [vmem:[%s249 + $0x10] sm:$0xff]
        %v296 = vld [vmem:[%s249 + $0x18] sm:$0xff]
        %v297 = vld [vmem:[%s249 + $0x20] sm:$0xff]
        %v298 = vld [vmem:[%s249 + $0x28] sm:$0xff]
        %v299 = vld [vmem:[%s249 + $0x30] sm:$0xff]
        %v300 = vld [vmem:[%s249 + $0x38] sm:$0xff]
        %v301 = vld [vmem:[#allocation5] sm:$0xff]
        %v302 = vld [vmem:[#allocation5 + $0x8] sm:$0xff]
        %v303 = vld [vmem:[#allocation5 + $0x10] sm:$0xff]
        %v304 = vld [vmem:[#allocation5 + $0x18] sm:$0xff]
        %v305 = vld [vmem:[#allocation5 + $0x20] sm:$0xff]
        %v306 = vld [vmem:[#allocation5 + $0x28] sm:$0xff]
        %v307 = vld [vmem:[#allocation5 + $0x30] sm:$0xff]
        %v308 = vld [vmem:[#allocation5 + $0x38] sm:$0xff]
        %v309 = vld [vmem:[#allocation5 + $0x40] sm:$0xff]
        %v310 = vld [vmem:[#allocation5 + $0x48] sm:$0xff]
        %v311 = vld [vmem:[#allocation5 + $0x50] sm:$0xff]
        %v312 = vld [vmem:[#allocation5 + $0x58] sm:$0xff]
        %v313 = vld [vmem:[#allocation5 + $0x60] sm:$0xff]
        %v314 = vld [vmem:[#allocation5 + $0x68] sm:$0xff]
        %v315 = vld [vmem:[#allocation5 + $0x70] sm:$0xff]
        %v316 = vld [vmem:[#allocation5 + $0x78] sm:$0xff]
        %v317 = vld [vmem:[#allocation5 + $0x80] sm:$0xff]
        %v318 = vld [vmem:[#allocation5 + $0x88] sm:$0xff]
        %v319 = vld [vmem:[#allocation5 + $0x90] sm:$0xff]
        %v320 = vld [vmem:[#allocation5 + $0x98] sm:$0xff]
        %v321 = vld [vmem:[#allocation5 + $0xa0] sm:$0xff]
        %v322 = vld [vmem:[#allocation5 + $0xa8] sm:$0xff]
        %v323 = vld [vmem:[#allocation5 + $0xb0] sm:$0xff]
        %v324 = vld [vmem:[#allocation5 + $0xb8] sm:$0xff]
        %v325 = vld [vmem:[#allocation5 + $0xc0] sm:$0xff]
        %v326 = vld [vmem:[#allocation5 + $0xc8] sm:$0xff]
        %v327 = vld [vmem:[#allocation5 + $0xd0] sm:$0xff]
        %v328 = vld [vmem:[#allocation5 + $0xd8] sm:$0xff]
        %v329 = vld [vmem:[#allocation5 + $0xe0] sm:$0xff]
        %v330 = vld [vmem:[#allocation5 + $0xe8] sm:$0xff]
        %v331 = vld [vmem:[#allocation5 + $0xf0] sm:$0xff]
        %v332 = vld [vmem:[#allocation5 + $0xf8] sm:$0xff]
        %v334 = vlaneseq
        %v335 = vshrl.u32 %v334, 7
        %v336 = vsub.s32 0, %v335
        %v337 = vrot.slane %v290, %v336
        %v338 = vlaneseq
        %v339 = vshrl.u32 %v338, 7
        %v340 = vsub.s32 1, %v339
        %v341 = vrot.slane %v290, %v340
        %v352 = vunpack.c.l.b16 %v293
        %v353 = vunpack.c.h.b16 %v293
        %v354 = vunpack.c.l.b16 %v294
        %v355 = vunpack.c.h.b16 %v294
        %v356 = vunpack.c.l.b16 %v295
        %v357 = vunpack.c.h.b16 %v295
        %v358 = vunpack.c.l.b16 %v296
        %v359 = vunpack.c.h.b16 %v296
        %v360 = vunpack.c.l.b16 %v297
        %v361 = vunpack.c.h.b16 %v297
        %v362 = vunpack.c.l.b16 %v298
        %v363 = vunpack.c.h.b16 %v298
        %v364 = vunpack.c.l.b16 %v299
        %v365 = vunpack.c.h.b16 %v299
        %v366 = vunpack.c.l.b16 %v300
        %v367 = vunpack.c.h.b16 %v300
        %v368 = vpack.c.b16 %v354, %v352
        %v369 = vpack.c.b16 %v355, %v353
        %v370 = vpack.c.b16 %v358, %v356
        %v371 = vpack.c.b16 %v359, %v357
        %v372 = vpack.c.b16 %v362, %v360
        %v373 = vpack.c.b16 %v363, %v361
        %v374 = vpack.c.b16 %v366, %v364
        %v375 = vpack.c.b16 %v367, %v365
        %v416 = vunpack.c.l.b16 %v301
        %v417 = vunpack.c.h.b16 %v301
        %v418 = vunpack.c.l.b16 %v302
        %v419 = vunpack.c.h.b16 %v302
        %v420 = vunpack.c.l.b16 %v303
        %v421 = vunpack.c.h.b16 %v303
        %v422 = vunpack.c.l.b16 %v304
        %v423 = vunpack.c.h.b16 %v304
        %v424 = vunpack.c.l.b16 %v305
        %v425 = vunpack.c.h.b16 %v305
        %v426 = vunpack.c.l.b16 %v306
        %v427 = vunpack.c.h.b16 %v306
        %v428 = vunpack.c.l.b16 %v307
        %v429 = vunpack.c.h.b16 %v307
        %v430 = vunpack.c.l.b16 %v308
        %v431 = vunpack.c.h.b16 %v308
        %v432 = vunpack.c.l.b16 %v309
        %v433 = vunpack.c.h.b16 %v309
        %v434 = vunpack.c.l.b16 %v310
        %v435 = vunpack.c.h.b16 %v310
        %v436 = vunpack.c.l.b16 %v311
        %v437 = vunpack.c.h.b16 %v311
        %v438 = vunpack.c.l.b16 %v312
        %v439 = vunpack.c.h.b16 %v312
        %v440 = vunpack.c.l.b16 %v313
        %v441 = vunpack.c.h.b16 %v313
        %v442 = vunpack.c.l.b16 %v314
        %v443 = vunpack.c.h.b16 %v314
        %v444 = vunpack.c.l.b16 %v315
        %v445 = vunpack.c.h.b16 %v315
        %v446 = vunpack.c.l.b16 %v316
        %v447 = vunpack.c.h.b16 %v316
        %v448 = vunpack.c.l.b16 %v317
        %v449 = vunpack.c.h.b16 %v317
        %v450 = vunpack.c.l.b16 %v318
        %v451 = vunpack.c.h.b16 %v318
        %v452 = vunpack.c.l.b16 %v319
        %v453 = vunpack.c.h.b16 %v319
        %v454 = vunpack.c.l.b16 %v320
        %v455 = vunpack.c.h.b16 %v320
        %v456 = vunpack.c.l.b16 %v321
        %v457 = vunpack.c.h.b16 %v321
        %v458 = vunpack.c.l.b16 %v322
        %v459 = vunpack.c.h.b16 %v322
        %v460 = vunpack.c.l.b16 %v323
        %v461 = vunpack.c.h.b16 %v323
        %v462 = vunpack.c.l.b16 %v324
        %v463 = vunpack.c.h.b16 %v324
        %v464 = vunpack.c.l.b16 %v325
        %v465 = vunpack.c.h.b16 %v325
        %v466 = vunpack.c.l.b16 %v326
        %v467 = vunpack.c.h.b16 %v326
        %v468 = vunpack.c.l.b16 %v327
        %v469 = vunpack.c.h.b16 %v327
        %v470 = vunpack.c.l.b16 %v328
        %v471 = vunpack.c.h.b16 %v328
        %v472 = vunpack.c.l.b16 %v329
        %v473 = vunpack.c.h.b16 %v329
        %v474 = vunpack.c.l.b16 %v330
        %v475 = vunpack.c.h.b16 %v330
        %v476 = vunpack.c.l.b16 %v331
        %v477 = vunpack.c.h.b16 %v331
        %v478 = vunpack.c.l.b16 %v332
        %v479 = vunpack.c.h.b16 %v332
        %v480 = vpack.c.b16 %v418, %v416
        %v481 = vpack.c.b16 %v419, %v417
        %v482 = vpack.c.b16 %v422, %v420
        %v483 = vpack.c.b16 %v423, %v421
        %v484 = vpack.c.b16 %v426, %v424
        %v485 = vpack.c.b16 %v427, %v425
        %v486 = vpack.c.b16 %v430, %v428
        %v487 = vpack.c.b16 %v431, %v429
        %v488 = vpack.c.b16 %v434, %v432
        %v489 = vpack.c.b16 %v435, %v433
        %v490 = vpack.c.b16 %v438, %v436
        %v491 = vpack.c.b16 %v439, %v437
        %v492 = vpack.c.b16 %v442, %v440
        %v493 = vpack.c.b16 %v443, %v441
        %v494 = vpack.c.b16 %v446, %v444
        %v495 = vpack.c.b16 %v447, %v445
        %v496 = vpack.c.b16 %v450, %v448
        %v497 = vpack.c.b16 %v451, %v449
        %v498 = vpack.c.b16 %v454, %v452
        %v499 = vpack.c.b16 %v455, %v453
        %v500 = vpack.c.b16 %v458, %v456
        %v501 = vpack.c.b16 %v459, %v457
        %v502 = vpack.c.b16 %v462, %v460
        %v503 = vpack.c.b16 %v463, %v461
        %v504 = vpack.c.b16 %v466, %v464
        %v505 = vpack.c.b16 %v467, %v465
        %v506 = vpack.c.b16 %v470, %v468
        %v507 = vpack.c.b16 %v471, %v469
        %v508 = vpack.c.b16 %v474, %v472
        %v509 = vpack.c.b16 %v475, %v473
        %v510 = vpack.c.b16 %v478, %v476
        %v511 = vpack.c.b16 %v479, %v477
        %544 = vmatprep.subr.bf16.mxu0 %v481
        %545 = vmatpush1.bf16.msra.mxu0 %v480
        %546 = vmatprep.subr.bf16.mxu0 %v483
        %547 = vmatpush1.bf16.msra.mxu0 %v482
        %548 = vmatprep.subr.bf16.mxu0 %v485
        %549 = vmatpush1.bf16.msra.mxu0 %v484
        %550 = vmatprep.subr.bf16.mxu0 %v487
        %551 = vmatpush1.bf16.msra.mxu0 %v486
        %552 = vmatprep.subr.bf16.mxu0 %v489
        %553 = vmatpush1.bf16.msra.mxu0 %v488
        %554 = vmatprep.subr.bf16.mxu0 %v491
        %555 = vmatpush1.bf16.msra.mxu0 %v490
        %556 = vmatprep.subr.bf16.mxu0 %v493
        %557 = vmatpush1.bf16.msra.mxu0 %v492
        %558 = vmatprep.subr.bf16.mxu0 %v495
        %559 = vmatpush1.bf16.msra.mxu0 %v494
        %560 = vmatprep.subr.bf16.mxu0 %v497
        %561 = vmatpush1.bf16.msra.mxu0 %v496
        %562 = vmatprep.subr.bf16.mxu0 %v499
        %563 = vmatpush1.bf16.msra.mxu0 %v498
        %564 = vmatprep.subr.bf16.mxu0 %v501
        %565 = vmatpush1.bf16.msra.mxu0 %v500
        %566 = vmatprep.subr.bf16.mxu0 %v503
        %567 = vmatpush1.bf16.msra.mxu0 %v502
        %568 = vmatprep.subr.bf16.mxu0 %v505
        %569 = vmatpush1.bf16.msra.mxu0 %v504
        %570 = vmatprep.subr.bf16.mxu0 %v507
        %571 = vmatpush1.bf16.msra.mxu0 %v506
        %572 = vmatprep.subr.bf16.mxu0 %v509
        %573 = vmatpush1.bf16.msra.mxu0 %v508
        %574 = vmatprep.subr.bf16.mxu0 %v511
        %575 = vmatpush1.bf16.msra.mxu0 %v510
        %576 = vmatprep.mubr.bf16.mxu0 %v369
        %577 = vmatmul.mubr.bf16.gmra.mrb[0].mxu0 %v368
        %v578 = vpop.f32.mrb[0].mxu0
        %v579 = vadd.f32 %v337, %v578
        %v580 = vpop.f32.mrb[0].mxu0
        %v581 = vadd.f32 %v341, %v580
        %v582 = vpop.f32.mrb[0].mxu0
        %v583 = vadd.f32 %v337, %v582
        %v584 = vpop.f32.mrb[0].mxu0
        %v585 = vadd.f32 %v341, %v584
        %586 = vmatprep.mubr.bf16.mxu0 %v371
        %587 = vmatmul.mubr.bf16.gmra.mrb[0].mxu0 %v370
        %v588 = vpop.f32.mrb[0].mxu0
        %v589 = vadd.f32 %v337, %v588
        %v590 = vpop.f32.mrb[0].mxu0
        %v591 = vadd.f32 %v341, %v590
        %v592 = vpop.f32.mrb[0].mxu0
        %v593 = vadd.f32 %v337, %v592
        %v594 = vpop.f32.mrb[0].mxu0
        %v595 = vadd.f32 %v341, %v594
        %596 = vmatprep.mubr.bf16.mxu0 %v373
        %597 = vmatmul.mubr.bf16.gmra.mrb[0].mxu0 %v372
        %v598 = vpop.f32.mrb[0].mxu0
        %v599 = vadd.f32 %v337, %v598
        %v600 = vpop.f32.mrb[0].mxu0
        %v601 = vadd.f32 %v341, %v600
        %v602 = vpop.f32.mrb[0].mxu0
        %v603 = vadd.f32 %v337, %v602
        %v604 = vpop.f32.mrb[0].mxu0
        %v605 = vadd.f32 %v341, %v604
        %606 = vmatprep.mubr.bf16.mxu0 %v375
        %607 = vmatmul.mubr.bf16.gmra.mrb[0].mxu0 %v374
        %v608 = vpop.f32.mrb[0].mxu0
        %v609 = vadd.f32 %v337, %v608
        %v610 = vpop.f32.mrb[0].mxu0
        %v611 = vadd.f32 %v341, %v610
        %v612 = vpop.f32.mrb[0].mxu0
        %v613 = vadd.f32 %v337, %v612
        %v614 = vpop.f32.mrb[0].mxu0
        %v615 = vadd.f32 %v341, %v614
        %616 = vdwg.mxu0
        %v617 = vmax.f32 %v579, 0.0
        %v618 = vmax.f32 %v581, 0.0
        %v619 = vmax.f32 %v583, 0.0
        %v620 = vmax.f32 %v585, 0.0
        %v621 = vmax.f32 %v589, 0.0
        %v622 = vmax.f32 %v591, 0.0
        %v623 = vmax.f32 %v593, 0.0
        %v624 = vmax.f32 %v595, 0.0
        %v625 = vmax.f32 %v599, 0.0
        %v626 = vmax.f32 %v601, 0.0
        %v627 = vmax.f32 %v603, 0.0
        %v628 = vmax.f32 %v605, 0.0
        %v629 = vmax.f32 %v609, 0.0
        %v630 = vmax.f32 %v611, 0.0
        %v631 = vmax.f32 %v613, 0.0
        %v632 = vmax.f32 %v615, 0.0
        %v633 = vrot.slane %v617, 4
        %v634 = vadd.f32 %v617, %v633
        %v635 = vrot.slane %v634, 2
        %v636 = vadd.f32 %v634, %v635
        %v637 = vrot.slane %v636, 1
        %v638 = vadd.f32 %v636, %v637
        %v639 = vrot.slane %v618, 4
        %v640 = vadd.f32 %v618, %v639
        %v641 = vrot.slane %v640, 2
        %v642 = vadd.f32 %v640, %v641
        %v643 = vrot.slane %v642, 1
        %v644 = vadd.f32 %v642, %v643
        %v645 = vrot.slane %v619, 4
        %v646 = vadd.f32 %v619, %v645
        %v647 = vrot.slane %v646, 2
        %v648 = vadd.f32 %v646, %v647
        %v649 = vrot.slane %v648, 1
        %v650 = vadd.f32 %v648, %v649
        %v651 = vrot.slane %v620, 4
        %v652 = vadd.f32 %v620, %v651
        %v653 = vrot.slane %v652, 2
        %v654 = vadd.f32 %v652, %v653
        %v655 = vrot.slane %v654, 1
        %v656 = vadd.f32 %v654, %v655
        %v657 = vrot.slane %v621, 4
        %v658 = vadd.f32 %v621, %v657
        %v659 = vrot.slane %v658, 2
        %v660 = vadd.f32 %v658, %v659
        %v661 = vrot.slane %v660, 1
        %v662 = vadd.f32 %v660, %v661
        %v663 = vrot.slane %v622, 4
        %v664 = vadd.f32 %v622, %v663
        %v665 = vrot.slane %v664, 2
        %v666 = vadd.f32 %v664, %v665
        %v667 = vrot.slane %v666, 1
        %v668 = vadd.f32 %v666, %v667
        %v669 = vrot.slane %v623, 4
        %v670 = vadd.f32 %v623, %v669
        %v671 = vrot.slane %v670, 2
        %v672 = vadd.f32 %v670, %v671
        %v673 = vrot.slane %v672, 1
        %v674 = vadd.f32 %v672, %v673
        %v675 = vrot.slane %v624, 4
        %v676 = vadd.f32 %v624, %v675
        %v677 = vrot.slane %v676, 2
        %v678 = vadd.f32 %v676, %v677
        %v679 = vrot.slane %v678, 1
        %v680 = vadd.f32 %v678, %v679
        %v681 = vrot.slane %v625, 4
        %v682 = vadd.f32 %v625, %v681
        %v683 = vrot.slane %v682, 2
        %v684 = vadd.f32 %v682, %v683
        %v685 = vrot.slane %v684, 1
        %v686 = vadd.f32 %v684, %v685
        %v687 = vrot.slane %v626, 4
        %v688 = vadd.f32 %v626, %v687
        %v689 = vrot.slane %v688, 2
        %v690 = vadd.f32 %v688, %v689
        %v691 = vrot.slane %v690, 1
        %v692 = vadd.f32 %v690, %v691
        %v693 = vrot.slane %v627, 4
        %v694 = vadd.f32 %v627, %v693
        %v695 = vrot.slane %v694, 2
        %v696 = vadd.f32 %v694, %v695
        %v697 = vrot.slane %v696, 1
        %v698 = vadd.f32 %v696, %v697
        %v699 = vrot.slane %v628, 4
        %v700 = vadd.f32 %v628, %v699
        %v701 = vrot.slane %v700, 2
        %v702 = vadd.f32 %v700, %v701
        %v703 = vrot.slane %v702, 1
        %v704 = vadd.f32 %v702, %v703
        %v705 = vrot.slane %v629, 4
        %v706 = vadd.f32 %v629, %v705
        %v707 = vrot.slane %v706, 2
        %v708 = vadd.f32 %v706, %v707
        %v709 = vrot.slane %v708, 1
        %v710 = vadd.f32 %v708, %v709
        %v711 = vrot.slane %v630, 4
        %v712 = vadd.f32 %v630, %v711
        %v713 = vrot.slane %v712, 2
        %v714 = vadd.f32 %v712, %v713
        %v715 = vrot.slane %v714, 1
        %v716 = vadd.f32 %v714, %v715
        %v717 = vrot.slane %v631, 4
        %v718 = vadd.f32 %v631, %v717
        %v719 = vrot.slane %v718, 2
        %v720 = vadd.f32 %v718, %v719
        %v721 = vrot.slane %v720, 1
        %v722 = vadd.f32 %v720, %v721
        %v723 = vrot.slane %v632, 4
        %v724 = vadd.f32 %v632, %v723
        %v725 = vrot.slane %v724, 2
        %v726 = vadd.f32 %v724, %v725
        %v727 = vrot.slane %v726, 1
        %v728 = vadd.f32 %v726, %v727
        %vm729 = vcmask 1040384
        %v730 = vsel %vm729, %v638, %v650
        %v731 = vsel %vm729, %v644, %v656
        %vm732 = vcmask 1041408
        %v733 = vsel %vm732, %v730, %v662
        %v734 = vsel %vm732, %v731, %v668
        %vm735 = vcmask 1042432
        %v736 = vsel %vm735, %v733, %v674
        %v737 = vsel %vm735, %v734, %v680
        %vm738 = vcmask 1043456
        %v739 = vsel %vm738, %v736, %v686
        %v740 = vsel %vm738, %v737, %v692
        %vm741 = vcmask 1044480
        %v742 = vsel %vm741, %v739, %v698
        %v743 = vsel %vm741, %v740, %v704
        %vm744 = vcmask 1045504
        %v745 = vsel %vm744, %v742, %v710
        %v746 = vsel %vm744, %v743, %v716
        %vm747 = vcmask 1046528
        %v748 = vsel %vm747, %v745, %v722
        %v749 = vsel %vm747, %v746, %v728
        %v750 = vpack.c.bf16 %v748, %v748
        %v751 = vpack.c.bf16 %v749, %v749
        %v752 = vld [vmem:[#allocation7] sm:$0xf]
        %v753 = vld [vmem:[#allocation7 + $0x4] sm:$0xf]
        %v754 = vld [vmem:[#allocation7 + $0x8] sm:$0xf]
        %v755 = vld [vmem:[#allocation7 + $0xc] sm:$0xf]
        %v756 = vld [vmem:[#allocation7 + $0x10] sm:$0xf]
        %v757 = vld [vmem:[#allocation7 + $0x14] sm:$0xf]
        %v758 = vld [vmem:[#allocation7 + $0x18] sm:$0xf]
        %v759 = vld [vmem:[#allocation7 + $0x1c] sm:$0xf]
        %v760 = vld [vmem:[#allocation7 + $0x20] sm:$0xf]
        %v761 = vld [vmem:[#allocation7 + $0x24] sm:$0xf]
        %v762 = vld [vmem:[#allocation7 + $0x28] sm:$0xf]
        %v763 = vld [vmem:[#allocation7 + $0x2c] sm:$0xf]
        %v764 = vld [vmem:[#allocation7 + $0x30] sm:$0xf]
        %v765 = vld [vmem:[#allocation7 + $0x34] sm:$0xf]
        %v766 = vld [vmem:[#allocation7 + $0x38] sm:$0xf]
        %v767 = vld [vmem:[#allocation7 + $0x3c] sm:$0xf]
        %v768 = vld [vmem:[#allocation7 + $0x40] sm:$0xf]
        %v769 = vld [vmem:[#allocation7 + $0x44] sm:$0xf]
        %v770 = vld [vmem:[#allocation7 + $0x48] sm:$0xf]
        %v771 = vld [vmem:[#allocation7 + $0x4c] sm:$0xf]
        %v772 = vld [vmem:[#allocation7 + $0x50] sm:$0xf]
        %v773 = vld [vmem:[#allocation7 + $0x54] sm:$0xf]
        %v774 = vld [vmem:[#allocation7 + $0x58] sm:$0xf]
        %v775 = vld [vmem:[#allocation7 + $0x5c] sm:$0xf]
        %v776 = vld [vmem:[#allocation7 + $0x60] sm:$0xf]
        %v777 = vld [vmem:[#allocation7 + $0x64] sm:$0xf]
        %v778 = vld [vmem:[#allocation7 + $0x68] sm:$0xf]
        %v779 = vld [vmem:[#allocation7 + $0x6c] sm:$0xf]
        %v780 = vld [vmem:[#allocation7 + $0x70] sm:$0xf]
        %v781 = vld [vmem:[#allocation7 + $0x74] sm:$0xf]
        %v782 = vld [vmem:[#allocation7 + $0x78] sm:$0xf]
        %v783 = vld [vmem:[#allocation7 + $0x7c] sm:$0xf]
        %v785 = vlaneseq
        %v786 = vshrl.u32 %v785, 7
        %v787 = vsub.s32 0, %v786
        %v788 = vrot.slane %v291, %v787
        %v822 = vunpack.c.l.b16 %v752
        %v823 = vunpack.c.l.b16 %v753
        %v824 = vunpack.c.l.b16 %v754
        %v825 = vunpack.c.l.b16 %v755
        %v826 = vunpack.c.l.b16 %v756
        %v827 = vunpack.c.l.b16 %v757
        %v828 = vunpack.c.l.b16 %v758
        %v829 = vunpack.c.l.b16 %v759
        %v830 = vunpack.c.l.b16 %v760
        %v831 = vunpack.c.l.b16 %v761
        %v832 = vunpack.c.l.b16 %v762
        %v833 = vunpack.c.l.b16 %v763
        %v834 = vunpack.c.l.b16 %v764
        %v835 = vunpack.c.l.b16 %v765
        %v836 = vunpack.c.l.b16 %v766
        %v837 = vunpack.c.l.b16 %v767
        %v838 = vunpack.c.l.b16 %v768
        %v839 = vunpack.c.l.b16 %v769
        %v840 = vunpack.c.l.b16 %v770
        %v841 = vunpack.c.l.b16 %v771
        %v842 = vunpack.c.l.b16 %v772
        %v843 = vunpack.c.l.b16 %v773
        %v844 = vunpack.c.l.b16 %v774
        %v845 = vunpack.c.l.b16 %v775
        %v846 = vunpack.c.l.b16 %v776
        %v847 = vunpack.c.l.b16 %v777
        %v848 = vunpack.c.l.b16 %v778
        %v849 = vunpack.c.l.b16 %v779
        %v850 = vunpack.c.l.b16 %v780
        %v851 = vunpack.c.l.b16 %v781
        %v852 = vunpack.c.l.b16 %v782
        %v853 = vunpack.c.l.b16 %v783
        %v854 = vpack.c.b16 %v823, %v822
        %v855 = vpack.c.b16 %v825, %v824
        %v856 = vpack.c.b16 %v827, %v826
        %v857 = vpack.c.b16 %v829, %v828
        %v858 = vpack.c.b16 %v831, %v830
        %v859 = vpack.c.b16 %v833, %v832
        %v860 = vpack.c.b16 %v835, %v834
        %v861 = vpack.c.b16 %v837, %v836
        %v862 = vpack.c.b16 %v839, %v838
        %v863 = vpack.c.b16 %v841, %v840
        %v864 = vpack.c.b16 %v843, %v842
        %v865 = vpack.c.b16 %v845, %v844
        %v866 = vpack.c.b16 %v847, %v846
        %v867 = vpack.c.b16 %v849, %v848
        %v868 = vpack.c.b16 %v851, %v850
        %v869 = vpack.c.b16 %v853, %v852
        %886 = vmatprep.subr.bf16.mxu0 0
        %887 = vmatpush1.bf16.msra.mxu0 %v854
        %888 = vmatprep.subr.bf16.mxu0 0
        %889 = vmatpush1.bf16.msra.mxu0 %v855
        %890 = vmatprep.subr.bf16.mxu0 0
        %891 = vmatpush1.bf16.msra.mxu0 %v856
        %892 = vmatprep.subr.bf16.mxu0 0
        %893 = vmatpush1.bf16.msra.mxu0 %v857
        %894 = vmatprep.subr.bf16.mxu0 0
        %895 = vmatpush1.bf16.msra.mxu0 %v858
        %896 = vmatprep.subr.bf16.mxu0 0
        %897 = vmatpush1.bf16.msra.mxu0 %v859
        %898 = vmatprep.subr.bf16.mxu0 0
        %899 = vmatpush1.bf16.msra.mxu0 %v860
        %900 = vmatprep.subr.bf16.mxu0 0
        %901 = vmatpush1.bf16.msra.mxu0 %v861
        %902 = vmatprep.subr.bf16.mxu0 0
        %903 = vmatpush1.bf16.msra.mxu0 %v862
        %904 = vmatprep.subr.bf16.mxu0 0
        %905 = vmatpush1.bf16.msra.mxu0 %v863
        %906 = vmatprep.subr.bf16.mxu0 0
        %907 = vmatpush1.bf16.msra.mxu0 %v864
        %908 = vmatprep.subr.bf16.mxu0 0
        %909 = vmatpush1.bf16.msra.mxu0 %v865
        %910 = vmatprep.subr.bf16.mxu0 0
        %911 = vmatpush1.bf16.msra.mxu0 %v866
        %912 = vmatprep.subr.bf16.mxu0 0
        %913 = vmatpush1.bf16.msra.mxu0 %v867
        %914 = vmatprep.subr.bf16.mxu0 0
        %915 = vmatpush1.bf16.msra.mxu0 %v868
        %916 = vmatprep.subr.bf16.mxu0 0
        %917 = vmatpush1.bf16.msra.mxu0 %v869
        %918 = vmatprep.mubr.bf16.mxu0 %v751
        %919 = vmatmul.mubr.bf16.gmra.mrb[0].mxu0 %v750
        %v920 = vpop.f32.mrb[0].mxu0
        %v921 = vadd.f32 %v788, %v920
        %v922 = vpop.f32.mrb[0].mxu0
        %v923 = vpop.f32.mrb[0].mxu0
        %v924 = vpop.f32.mrb[0].mxu0
        %925 = vdwg.mxu0
        %v926 = vmax.f32 %v921, 0.0
        %v927 = vpack.c.bf16 %v926, %v926
        %v928 = vld [vmem:[#allocation8] sm:$0xf]
        %v929 = vld [vmem:[#allocation8 + $0x4] sm:$0xf]
        %v930 = vld [vmem:[#allocation8 + $0x8] sm:$0xf]
        %v931 = vld [vmem:[#allocation8 + $0xc] sm:$0xf]
        %v932 = vld [vmem:[#allocation8 + $0x10] sm:$0xf]
        %v933 = vld [vmem:[#allocation8 + $0x14] sm:$0xf]
        %v934 = vld [vmem:[#allocation8 + $0x18] sm:$0xf]
        %v935 = vld [vmem:[#allocation8 + $0x1c] sm:$0xf]
        %v936 = vld [vmem:[#allocation8 + $0x20] sm:$0xf]
        %v937 = vld [vmem:[#allocation8 + $0x24] sm:$0xf]
        %v938 = vld [vmem:[#allocation8 + $0x28] sm:$0xf]
        %v939 = vld [vmem:[#allocation8 + $0x2c] sm:$0xf]
        %v940 = vld [vmem:[#allocation8 + $0x30] sm:$0xf]
        %v941 = vld [vmem:[#allocation8 + $0x34] sm:$0xf]
        %v942 = vld [vmem:[#allocation8 + $0x38] sm:$0xf]
        %v943 = vld [vmem:[#allocation8 + $0x3c] sm:$0xf]
        %v945 = vlaneseq
        %v946 = vshrl.u32 %v945, 7
        %v947 = vsub.s32 0, %v946
        %v948 = vrot.slane %v292, %v947
        %v966 = vunpack.c.l.b16 %v928
        %v967 = vunpack.c.l.b16 %v929
        %v968 = vunpack.c.l.b16 %v930
        %v969 = vunpack.c.l.b16 %v931
        %v970 = vunpack.c.l.b16 %v932
        %v971 = vunpack.c.l.b16 %v933
        %v972 = vunpack.c.l.b16 %v934
        %v973 = vunpack.c.l.b16 %v935
        %v974 = vunpack.c.l.b16 %v936
        %v975 = vunpack.c.l.b16 %v937
        %v976 = vunpack.c.l.b16 %v938
        %v977 = vunpack.c.l.b16 %v939
        %v978 = vunpack.c.l.b16 %v940
        %v979 = vunpack.c.l.b16 %v941
        %v980 = vunpack.c.l.b16 %v942
        %v981 = vunpack.c.l.b16 %v943
        %v982 = vpack.c.b16 %v967, %v966
        %v983 = vpack.c.b16 %v969, %v968
        %v984 = vpack.c.b16 %v971, %v970
        %v985 = vpack.c.b16 %v973, %v972
        %v986 = vpack.c.b16 %v975, %v974
        %v987 = vpack.c.b16 %v977, %v976
        %v988 = vpack.c.b16 %v979, %v978
        %v989 = vpack.c.b16 %v981, %v980
        %998 = vmatprep.subr.bf16.mxu0 0
        %999 = vmatpush1.bf16.msra.mxu0 %v982
        %1000 = vmatprep.subr.bf16.mxu0 0
        %1001 = vmatpush1.bf16.msra.mxu0 %v983
        %1002 = vmatprep.subr.bf16.mxu0 0
        %1003 = vmatpush1.bf16.msra.mxu0 %v984
        %1004 = vmatprep.subr.bf16.mxu0 0
        %1005 = vmatpush1.bf16.msra.mxu0 %v985
        %1006 = vmatprep.subr.bf16.mxu0 0
        %1007 = vmatpush1.bf16.msra.mxu0 %v986
        %1008 = vmatprep.subr.bf16.mxu0 0
        %1009 = vmatpush1.bf16.msra.mxu0 %v987
        %1010 = vmatprep.subr.bf16.mxu0 0
        %1011 = vmatpush1.bf16.msra.mxu0 %v988
        %1012 = vmatprep.subr.bf16.mxu0 0
        %1013 = vmatpush1.bf16.msra.mxu0 %v989
        %1014 = vmatprep.subr.bf16.mxu0 0
        %1015 = vmatpush1.bf16.msra.mxu0 0
        %1016 = vmatprep.subr.bf16.mxu0 0
        %1017 = vmatpush1.bf16.msra.mxu0 0
        %1018 = vmatprep.subr.bf16.mxu0 0
        %1019 = vmatpush1.bf16.msra.mxu0 0
        %1020 = vmatprep.subr.bf16.mxu0 0
        %1021 = vmatpush1.bf16.msra.mxu0 0
        %1022 = vmatprep.subr.bf16.mxu0 0
        %1023 = vmatpush1.bf16.msra.mxu0 0
        %1024 = vmatprep.subr.bf16.mxu0 0
        %1025 = vmatpush1.bf16.msra.mxu0 0
        %1026 = vmatprep.subr.bf16.mxu0 0
        %1027 = vmatpush1.bf16.msra.mxu0 0
        %1028 = vmatprep.subr.bf16.mxu0 0
        %1029 = vmatpush1.bf16.msra.mxu0 0
        %1030 = vmatprep.mubr.bf16.mxu0 0
        %1031 = vmatmul.mubr.bf16.gmra.mrb[0].mxu0 %v927
        %v1032 = vpop.f32.mrb[0].mxu0
        %v1033 = vadd.f32 %v948, %v1032
        %v1034 = vpop.f32.mrb[0].mxu0
        %v1035 = vpop.f32.mrb[0].mxu0
        %v1036 = vpop.f32.mrb[0].mxu0
        %1037 = vdwg.mxu0
        %v1038 = vmul.f32 %v1033, %v1033
        %1039 = vadd.xlane.f32.xlu0 %v1038
        %v1040 = vpop.xlane.xlu0 %1039
        %v1041 = vmax.f32 %v1040, 1e-24
        %v1042 = vrsqrt.pop %v1041
        %v1043 = vmul.f32 %v1033, %v1042
        %1044 = vst [vmem:[%s287] sm:$0xff] %v1043
        %s1045 = sand.u32 %s142, 1
        %s1046 = scalar_lea.sflag [#allocation4], %s1045
        %s1047 = sand.u32 %s142, 1
        %s1048 = smul.addr %s1047, 8
        %s1049 = scalar_lea.vmem [#allocation10], %s1048
        // Predicated region
        $region57: #{tpu_custom_call.1} parent=39 // pred_check
          %p1050 = pneg %p152
        $region58: #{tpu_custom_call.1} parent=39 // pred_check_branch
          %1052 = sbr.rel (%p1050) target = $region60
        $region59: #{tpu_custom_call.1} parent=39 // pred_region
          %s1054 = ssub.s32 128, 128
          %1055 = vsyncadd %s1046, %s1054
          %s1056 = smul.addr %s24, 128
          %s1057 = scalar_lea.hbm %s5, %s1056
          %s1059 = sshll.u32 %s1049, 4
          %s1060 = int_to_ptr.vmem [resolvable:$true] %s1059
          %1062 = dma.vmem_to_hbm [thread:$0]  %s1060, 128, %s1057, %s1046
        $region60: #{tpu_custom_call.1} parent=39 // pred_fallthru
          _
      $region40: #{tpu_custom_call.1} parent=5 // pred_fallthru
        _
      %p1063 = scmp.le.s32.totalorder 2, %s19
      // Predicated region
      $region61: #{tpu_custom_call.1} parent=5 // pred_check
        %p1064 = pneg %p1063
      $region62: #{tpu_custom_call.1} parent=5 // pred_check_branch
        %1066 = sbr.rel (%p1064) target = $region64
      $region63: #{tpu_custom_call.1} parent=5 // pred_region
        %s1067 = ssub.s32 %s19, 2
        // Predicated region
        $region65: #{tpu_custom_call.1} parent=63 // pred_check
          %p1068 = pneg %p158
        $region66: #{tpu_custom_call.1} parent=63 // pred_check_branch
          %1070 = sbr.rel (%p1068) target = $region68
        $region67: #{tpu_custom_call.1} parent=63 // pred_region
          %s1071 = sand.u32 %s143, 1
          %s1072 = scalar_lea.sflag [#allocation4], %s1071
          %s1073 = sand.u32 %s143, 1
          %s1074 = smul.addr %s1073, 8
          %s1075 = scalar_lea.vmem [#allocation10], %s1074
          %1076 = dma.done %s1072, 128
        $region68: #{tpu_custom_call.1} parent=63 // pred_fallthru
          _
      $region64: #{tpu_custom_call.1} parent=5 // pred_fallthru
        _
    $region6: #{tpu_custom_call.1} parent=1 // loop_footer
      %s23 = sadd.s32 1, %s19
    $region7: #{tpu_custom_call.1} parent=1 // loop_footer_branch
      %18 = sbr.rel target = $region3
    $region8: #{tpu_custom_call.1} parent=1 // loop_exit
      _
    %1077 = vsyncpa [#allocation3], 1
    %s1078 = scalar_lea.sflag [#allocation3], 1
    %1079 = vsyncpa %s1078, 1
    %1080 = vsyncpa [#allocation6], 1
    %1081 = vsyncpa [#allocation9], 1
    %1082 = vsyncpa [#allocation4], 1
    %s1083 = scalar_lea.sflag [#allocation4], 1
    %1084 = vsyncpa %s1083, 1

</llo_original>
